<compile_context>
chip_gen: v6e
topology: v6e:2x2x1
jax: 0.10.0
libtpu: 0.0.40
codegen_flags: <defaults>
</compile_context>

<pallas_src>
import functools

import jax
import jax.numpy as jnp
from jax import lax
from jax.experimental import pallas as pl
from jax.experimental.pallas import tpu as pltpu


def _single_block_kernel(xl_row_ref, xl_col_ref, out_ref, *, t_valid: int):
    """Whole pair matrix in one shot (Tp <= single_block_max)."""
    x_row = xl_row_ref[0:1, :]          # (1, Tp)  -> x[j]
    l_row = xl_row_ref[1:2, :]          # (1, Tp)  -> label[j]
    x_col = xl_col_ref[:, 0:1]          # (Tp, 1)  -> x[i]
    l_col = xl_col_ref[:, 1:2]          # (Tp, 1)  -> label[i]
    tp = x_row.shape[1]

    # Pairwise XOR condition: (x[i] > x[j]) != (label[i] > label[j]).
    cond = (x_col > x_row) != (l_col > l_row)            # (Tp, Tp) bool

    # Strict upper triangle restricted to valid j (< T).
    ii = lax.broadcasted_iota(jnp.int32, (tp, tp), 0)
    jj = lax.broadcasted_iota(jnp.int32, (tp, tp), 1)
    valid = ii < jj
    if t_valid < tp:
        valid = valid & (jj < t_valid)

    m = (valid & cond).astype(jnp.float32)               # (Tp, Tp) 0/1 mask

    # total = sum_i d[i]*|{j: M[i,j]}| + sum_j d[j]*|{i: M[i,j]}|
    rs = jnp.sum(m, axis=1, keepdims=True)               # (Tp, 1)
    cs = jnp.sum(m, axis=0, keepdims=True)               # (1, Tp)
    d_row = jnp.abs(x_row - l_row)                       # (1, Tp)
    d_col = jnp.abs(x_col - l_col)                       # (Tp, 1)
    total = jnp.sum(d_col * rs) + jnp.sum(d_row * cs)

    # Lane-dense store: broadcast the scalar across the (1, 128) output row.
    out_ref[...] = jnp.zeros_like(out_ref) + total / jnp.float32(t_valid)


def _tiled_kernel(xl_row_ref, xl_col_ref, out_ref, *,
                  tile: int, t_valid: int, t_padded: int):
    """Grid over (i_tile, j_tile) of the pair space with a resident accumulator."""
    gi = pl.program_id(0)
    gj = pl.program_id(1)

    @pl.when((gi == 0) & (gj == 0))
    def _init():
        out_ref[...] = jnp.zeros_like(out_ref)

    # Tiles entirely below the diagonal contribute nothing: skip their compute.
    @pl.when(gi <= gj)
    def _compute():
        x_row = xl_row_ref[0:1, :]      # (1, tile)  -> x[j]
        l_row = xl_row_ref[1:2, :]      # (1, tile)  -> label[j]
        x_col = xl_col_ref[:, 0:1]      # (tile, 1)  -> x[i]
        l_col = xl_col_ref[:, 1:2]      # (tile, 1)  -> label[i]

        cond = (x_col > x_row) != (l_col > l_row)        # (tile, tile)

        ii = lax.broadcasted_iota(jnp.int32, (tile, tile), 0) + gi * tile
        jj = lax.broadcasted_iota(jnp.int32, (tile, tile), 1) + gj * tile
        valid = ii < jj
        if t_valid < t_padded:
            valid = valid & (jj < t_valid)

        m = (valid & cond).astype(jnp.float32)

        rs = jnp.sum(m, axis=1, keepdims=True)           # (tile, 1)
        cs = jnp.sum(m, axis=0, keepdims=True)           # (1, tile)
        d_row = jnp.abs(x_row - l_row)
        d_col = jnp.abs(x_col - l_col)
        partial = jnp.sum(d_col * rs) + jnp.sum(d_row * cs)

        # Every lane carries the same running sum (lane-dense accumulate).
        out_ref[...] = out_ref[...] + partial


def comparing_loss(x, label, *, single_block_max: int = 512, tile: int = 256):
    """x: [T] float, label: [T] float -> [1] float32 (matches PyTorch)."""
    assert x.ndim == 1 and label.shape == x.shape
    t = x.shape[0]
    assert t >= 1, "T must be >= 1 (division by T)"

    x = x.astype(jnp.float32)
    label = label.astype(jnp.float32)

    use_single = t <= single_block_max
    if use_single:
        tp = max(128, ((t + 127) // 128) * 128)
    else:
        tp = ((t + tile - 1) // tile) * tile

    if tp != t:
        x = jnp.pad(x, (0, tp - t))
        label = jnp.pad(label, (0, tp - t))

    xl_row = jnp.stack([x, label], axis=0)   # (2, Tp): row 0 = x, row 1 = label
    xl_col = jnp.stack([x, label], axis=1)   # (Tp, 2): col 0 = x, col 1 = label

    if use_single:
        kernel = functools.partial(_single_block_kernel, t_valid=t)
        out = pl.pallas_call(
            kernel,
            out_shape=jax.ShapeDtypeStruct((1, 128), jnp.float32),
            in_specs=[
                pl.BlockSpec((2, tp), lambda: (0, 0)),
                pl.BlockSpec((tp, 2), lambda: (0, 0)),
            ],
            out_specs=pl.BlockSpec((1, 128), lambda: (0, 0)),
        )(xl_row, xl_col)
        return out[0, 0:1]                    # already divided by T in-kernel

    n = tp // tile
    kernel = functools.partial(_tiled_kernel, tile=tile, t_valid=t, t_padded=tp)
    out = pl.pallas_call(
        kernel,
        out_shape=jax.ShapeDtypeStruct((1, 128), jnp.float32),
        grid=(n, n),
        in_specs=[
            pl.BlockSpec((2, tile), lambda gi, gj: (0, gj)),     # j-tile of rows
            pl.BlockSpec((tile, 2), lambda gi, gj: (gi, 0)),     # i-tile of cols
        ],
        out_specs=pl.BlockSpec((1, 128), lambda gi, gj: (0, 0)),  # resident acc
        compiler_params=pltpu.CompilerParams(
            dimension_semantics=("arbitrary", "arbitrary")),
    )(xl_row, xl_col)
    return out[0, 0:1] / jnp.float32(t)


def _reference_loss(x, label):
    """Pure-JAX reference mirroring the PyTorch double loop."""
    t = x.shape[0]
    xi = x[:, None]; xj = x[None, :]
    li = label[:, None]; lj = label[None, :]
    cond = (xi > xj) != (li > lj)
    d = jnp.abs(x - label)
    pair = d[:, None] + d[None, :]
    ii = jnp.arange(t)[:, None]; jj = jnp.arange(t)[None, :]
    mask = ii < jj
    return (jnp.sum(jnp.where(mask & cond, pair, 0.0)) / t).reshape(1)


if __name__ == "__main__":
    key = jax.random.PRNGKey(0)
    k1, k2, k3, k4 = jax.random.split(key, 4)

    # Small T (typical use of this loss): single-block path.
    T1 = 8
    x1 = jax.random.normal(k1, (T1,), dtype=jnp.float32)
    l1 = jax.random.normal(k2, (T1,), dtype=jnp.float32)
    out1 = jax.block_until_ready(comparing_loss(x1, l1))
    ref1 = _reference_loss(x1, l1)
    assert out1.shape == (1,)
    assert jnp.allclose(out1, ref1, rtol=1e-5, atol=1e-5), (out1, ref1)

    # Larger T: force the tiled (grid + accumulator) path (Tp=512, 2x2 grid).
    T2 = 300
    x2 = jax.random.normal(k3, (T2,), dtype=jnp.float32)
    l2 = jax.random.normal(k4, (T2,), dtype=jnp.float32)
    out2 = jax.block_until_ready(comparing_loss(x2, l2, single_block_max=128))
    ref2 = _reference_loss(x2, l2)
    assert out2.shape == (1,)
    assert jnp.allclose(out2, ref2, rtol=1e-4, atol=1e-4), (out2, ref2)

    print("KERNEL_OK")
</pallas_src>

<mosaic_0001>
module attributes {stable_mosaic.version = 11 : i64} {
  func.func @_single_block_kernel(%arg0: memref<2x128xf32, #tpu.memory_space<vmem>>, %arg1: memref<128x2xf32, #tpu.memory_space<vmem>>, %arg2: memref<1x128xf32, #tpu.memory_space<vmem>>) attributes {dimension_semantics = [], scalar_prefetch = 0 : i64, scratch_operands = 0 : i64, tpu.core_type = #tpu.core_type<tc>} {
    %c0 = arith.constant 0 : index
    %c0_0 = arith.constant 0 : index
    %0 = vector.load %arg0[%c0, %c0_0] : memref<2x128xf32, #tpu.memory_space<vmem>>, vector<1x128xf32>
    %c1 = arith.constant 1 : index
    %c0_1 = arith.constant 0 : index
    %1 = vector.load %arg0[%c1, %c0_1] : memref<2x128xf32, #tpu.memory_space<vmem>>, vector<1x128xf32>
    %c0_2 = arith.constant 0 : index
    %c0_3 = arith.constant 0 : index
    %2 = vector.load %arg1[%c0_2, %c0_3] : memref<128x2xf32, #tpu.memory_space<vmem>>, vector<128x1xf32>
    %c0_4 = arith.constant 0 : index
    %c1_5 = arith.constant 1 : index
    %3 = vector.load %arg1[%c0_4, %c1_5] : memref<128x2xf32, #tpu.memory_space<vmem>>, vector<128x1xf32>
    %4 = vector.broadcast %2 : vector<128x1xf32> to vector<128x128xf32>
    %5 = vector.broadcast %0 : vector<1x128xf32> to vector<128x128xf32>
    %6 = arith.cmpf ogt, %4, %5 : vector<128x128xf32>
    %7 = vector.broadcast %3 : vector<128x1xf32> to vector<128x128xf32>
    %8 = vector.broadcast %1 : vector<1x128xf32> to vector<128x128xf32>
    %9 = arith.cmpf ogt, %7, %8 : vector<128x128xf32>
    %10 = arith.xori %6, %9 : vector<128x128xi1>
    %11 = tpu.iota {dimensions = array<i32: 0>} : vector<128x128xi32>
    %12 = tpu.iota {dimensions = array<i32: 1>} : vector<128x128xi32>
    %13 = arith.cmpi slt, %11, %12 : vector<128x128xi32>
    %c8_i32 = arith.constant 8 : i32
    %14 = vector.broadcast %c8_i32 : i32 to vector<128x128xi32>
    %15 = arith.cmpi slt, %12, %14 : vector<128x128xi32>
    %16 = arith.andi %13, %15 : vector<128x128xi1>
    %17 = arith.andi %16, %10 : vector<128x128xi1>
    %18 = arith.extui %17 : vector<128x128xi1> to vector<128x128xi32>
    %19 = arith.sitofp %18 : vector<128x128xi32> to vector<128x128xf32>
    %cst = arith.constant dense<0.000000e+00> : vector<128xf32>
    %20 = vector.multi_reduction <add>, %19, %cst [1] : vector<128x128xf32> to vector<128xf32>
    %21 = vector.shape_cast %20 : vector<128xf32> to vector<128x1xf32>
    %cst_6 = arith.constant dense<0.000000e+00> : vector<128xf32>
    %22 = vector.multi_reduction <add>, %19, %cst_6 [0] : vector<128x128xf32> to vector<128xf32>
    %23 = vector.shape_cast %22 : vector<128xf32> to vector<1x128xf32>
    %24 = arith.subf %0, %1 : vector<1x128xf32>
    %25 = math.absf %24 : vector<1x128xf32>
    %26 = arith.subf %2, %3 : vector<128x1xf32>
    %27 = math.absf %26 : vector<128x1xf32>
    %28 = arith.mulf %27, %21 : vector<128x1xf32>
    %29 = vector.shape_cast %28 : vector<128x1xf32> to vector<1x128x1xf32>
    %cst_7 = arith.constant dense<0.000000e+00> : vector<1xf32>
    %30 = vector.multi_reduction <add>, %29, %cst_7 [1, 2] : vector<1x128x1xf32> to vector<1xf32>
    %31 = vector.shape_cast %30 : vector<1xf32> to vector<1x1x1xf32>
    %32 = vector.extract %31[0, 0, 0] : f32 from vector<1x1x1xf32>
    %33 = arith.mulf %25, %23 : vector<1x128xf32>
    %34 = vector.shape_cast %33 : vector<1x128xf32> to vector<1x1x128xf32>
    %cst_8 = arith.constant dense<0.000000e+00> : vector<1xf32>
    %35 = vector.multi_reduction <add>, %34, %cst_8 [1, 2] : vector<1x1x128xf32> to vector<1xf32>
    %36 = vector.shape_cast %35 : vector<1xf32> to vector<1x1x1xf32>
    %37 = vector.extract %36[0, 0, 0] : f32 from vector<1x1x1xf32>
    %38 = arith.addf %32, %37 : f32
    %cst_9 = arith.constant 0.000000e+00 : f32
    %39 = vector.broadcast %cst_9 : f32 to vector<1x128xf32>
    %cst_10 = arith.constant 8.000000e+00 : f32
    %40 = arith.divf %38, %cst_10 : f32
    %41 = vector.broadcast %40 : f32 to vector<1x128xf32>
    %42 = arith.addf %39, %41 : vector<1x128xf32>
    %c0_11 = arith.constant 0 : index
    %c0_12 = arith.constant 0 : index
    %43 = vector.load %arg2[%c0_11, %c0_12] : memref<1x128xf32, #tpu.memory_space<vmem>>, vector<1x128xf32>
    tpu.vector_store %arg2[%c0_11, %c0_12], %42 {strides = array<i32>} : memref<1x128xf32, #tpu.memory_space<vmem>>, vector<1x128xf32>,
    return
  }
}

</mosaic_0001>

<llo_original>
// kernel: tpu_custom_call.1
$region0: #{tpu_custom_call.1}
  #allocation0 [shape = 'u32[]', space=smem, size = 0x4, offset = 0x4, fixed_abs, tag = 'smem constant byte address 0x4 - core index']
  #allocation1 [shape = 'u32[144,128]{1,0:T(1,128)}', space=vmem, size = 0x12000, scoped, tag = 'internal scratch']
  %s0 = inlined_call_operand.vmem [shape: f32[2,128], index: 0, kind: input, shape index: {}]
  %s1 = inlined_call_operand.vmem [shape: f32[128,2], index: 1, kind: input, shape index: {}]
  %s2 = inlined_call_operand.hbm [shape: f32[1,128], index: 2, kind: output, shape index: {}]
  %s3 = sld [smem:[#allocation0]]
  $region18: #{tpu_custom_call.1} parent=0
    _
  %s5 = ssub.s32 1, %s3
  %s6 = scalar_select 0, %s5, %s3
  $region1: #{tpu_custom_call.1} parent=0
    #allocation2 [shape = 'u8[512]{0}', space=vmem, size = 0x400, scoped, tag = 'output window, operand 0, single buffered']
    #allocation3 [shape = 's32[1]{0}', space=sflag, size = 0x4, scoped, tag = 'scoped memory for tpu_custom_call.1']
    %7 = vsyncpa [#allocation3], 0
    // Predicated region
    $region2: #{tpu_custom_call.1} parent=1 // pred_check
      _
    $region3: #{tpu_custom_call.1} parent=1 // pred_check_branch
      %9 = sbr.rel (0) target = $region5
    $region4: #{tpu_custom_call.1} parent=1 // pred_region
      _
    $region5: #{tpu_custom_call.1} parent=1 // pred_fallthru
      _
    // Predicated region
    $region6: #{tpu_custom_call.1} parent=1 // pred_check
      _
    $region7: #{tpu_custom_call.1} parent=1 // pred_check_branch
      %11 = sbr.rel (0) target = $region9
    $region8: #{tpu_custom_call.1} parent=1 // pred_region
      _
    $region9: #{tpu_custom_call.1} parent=1 // pred_fallthru
      _
    %v12 = vld [vmem:[%s0] sm:$0x1]
    %v13 = vld [vmem:[%s0 + $0x1] sm:$0x1]
    %v14 = vld [vmem:[%s1] sm:$0xff]
    %v15 = vld [vmem:[%s1 + $0x8] sm:$0xff]
    %v16 = vld [vmem:[%s1 + $0x10] sm:$0xff]
    %v17 = vld [vmem:[%s1 + $0x18] sm:$0xff]
    %v18 = vld [vmem:[%s1 + $0x20] sm:$0xff]
    %v19 = vld [vmem:[%s1 + $0x28] sm:$0xff]
    %v20 = vld [vmem:[%s1 + $0x30] sm:$0xff]
    %v21 = vld [vmem:[%s1 + $0x38] sm:$0xff]
    %v22 = vld [vmem:[%s1 + $0x40] sm:$0xff]
    %v23 = vld [vmem:[%s1 + $0x48] sm:$0xff]
    %v24 = vld [vmem:[%s1 + $0x50] sm:$0xff]
    %v25 = vld [vmem:[%s1 + $0x58] sm:$0xff]
    %v26 = vld [vmem:[%s1 + $0x60] sm:$0xff]
    %v27 = vld [vmem:[%s1 + $0x68] sm:$0xff]
    %v28 = vld [vmem:[%s1 + $0x70] sm:$0xff]
    %v29 = vld [vmem:[%s1 + $0x78] sm:$0xff]
    %31 = vset.pattern.permute.xlu0 0
    %32 = vperm.xlu0 %31, %v14
    %v33 = vpop.permute.xlu0 %32
    %36 = vset.pattern.permute.xlu0 0
    %37 = vperm.xlu0 %36, %v15
    %v38 = vpop.permute.xlu0 %37
    %41 = vset.pattern.permute.xlu0 0
    %42 = vperm.xlu0 %41, %v16
    %v43 = vpop.permute.xlu0 %42
    %46 = vset.pattern.permute.xlu0 0
    %47 = vperm.xlu0 %46, %v17
    %v48 = vpop.permute.xlu0 %47
    %51 = vset.pattern.permute.xlu0 0
    %52 = vperm.xlu0 %51, %v18
    %v53 = vpop.permute.xlu0 %52
    %56 = vset.pattern.permute.xlu0 0
    %57 = vperm.xlu0 %56, %v19
    %v58 = vpop.permute.xlu0 %57
    %61 = vset.pattern.permute.xlu0 0
    %62 = vperm.xlu0 %61, %v20
    %v63 = vpop.permute.xlu0 %62
    %66 = vset.pattern.permute.xlu0 0
    %67 = vperm.xlu0 %66, %v21
    %v68 = vpop.permute.xlu0 %67
    %71 = vset.pattern.permute.xlu0 0
    %72 = vperm.xlu0 %71, %v22
    %v73 = vpop.permute.xlu0 %72
    %76 = vset.pattern.permute.xlu0 0
    %77 = vperm.xlu0 %76, %v23
    %v78 = vpop.permute.xlu0 %77
    %81 = vset.pattern.permute.xlu0 0
    %82 = vperm.xlu0 %81, %v24
    %v83 = vpop.permute.xlu0 %82
    %86 = vset.pattern.permute.xlu0 0
    %87 = vperm.xlu0 %86, %v25
    %v88 = vpop.permute.xlu0 %87
    %91 = vset.pattern.permute.xlu0 0
    %92 = vperm.xlu0 %91, %v26
    %v93 = vpop.permute.xlu0 %92
    %96 = vset.pattern.permute.xlu0 0
    %97 = vperm.xlu0 %96, %v27
    %v98 = vpop.permute.xlu0 %97
    %101 = vset.pattern.permute.xlu0 0
    %102 = vperm.xlu0 %101, %v28
    %v103 = vpop.permute.xlu0 %102
    %106 = vset.pattern.permute.xlu0 0
    %107 = vperm.xlu0 %106, %v29
    %v108 = vpop.permute.xlu0 %107
    %v110 = vlaneseq
    %v111 = vshrl.u32 %v110, 7
    %v112 = vsub.s32 0, %v111
    %v113 = vrot.slane %v12, %v112
    %vm114 = vcmp.gt.f32.partialorder %v33, %v113
    %vm115 = vcmp.gt.f32.partialorder %v38, %v113
    %vm116 = vcmp.gt.f32.partialorder %v43, %v113
    %vm117 = vcmp.gt.f32.partialorder %v48, %v113
    %vm118 = vcmp.gt.f32.partialorder %v53, %v113
    %vm119 = vcmp.gt.f32.partialorder %v58, %v113
    %vm120 = vcmp.gt.f32.partialorder %v63, %v113
    %vm121 = vcmp.gt.f32.partialorder %v68, %v113
    %vm122 = vcmp.gt.f32.partialorder %v73, %v113
    %vm123 = vcmp.gt.f32.partialorder %v78, %v113
    %vm124 = vcmp.gt.f32.partialorder %v83, %v113
    %vm125 = vcmp.gt.f32.partialorder %v88, %v113
    %vm126 = vcmp.gt.f32.partialorder %v93, %v113
    %vm127 = vcmp.gt.f32.partialorder %v98, %v113
    %vm128 = vcmp.gt.f32.partialorder %v103, %v113
    %vm129 = vcmp.gt.f32.partialorder %v108, %v113
    %130 = vset.pattern.permute.xlu0 1
    %131 = vperm.xlu0 %130, %v14
    %v132 = vpop.permute.xlu0 %131
    %134 = vset.pattern.permute.xlu0 1
    %135 = vperm.xlu0 %134, %v15
    %v136 = vpop.permute.xlu0 %135
    %138 = vset.pattern.permute.xlu0 1
    %139 = vperm.xlu0 %138, %v16
    %v140 = vpop.permute.xlu0 %139
    %142 = vset.pattern.permute.xlu0 1
    %143 = vperm.xlu0 %142, %v17
    %v144 = vpop.permute.xlu0 %143
    %146 = vset.pattern.permute.xlu0 1
    %147 = vperm.xlu0 %146, %v18
    %v148 = vpop.permute.xlu0 %147
    %150 = vset.pattern.permute.xlu0 1
    %151 = vperm.xlu0 %150, %v19
    %v152 = vpop.permute.xlu0 %151
    %154 = vset.pattern.permute.xlu0 1
    %155 = vperm.xlu0 %154, %v20
    %v156 = vpop.permute.xlu0 %155
    %158 = vset.pattern.permute.xlu0 1
    %159 = vperm.xlu0 %158, %v21
    %v160 = vpop.permute.xlu0 %159
    %162 = vset.pattern.permute.xlu0 1
    %163 = vperm.xlu0 %162, %v22
    %v164 = vpop.permute.xlu0 %163
    %166 = vset.pattern.permute.xlu0 1
    %167 = vperm.xlu0 %166, %v23
    %v168 = vpop.permute.xlu0 %167
    %170 = vset.pattern.permute.xlu0 1
    %171 = vperm.xlu0 %170, %v24
    %v172 = vpop.permute.xlu0 %171
    %174 = vset.pattern.permute.xlu0 1
    %175 = vperm.xlu0 %174, %v25
    %v176 = vpop.permute.xlu0 %175
    %178 = vset.pattern.permute.xlu0 1
    %179 = vperm.xlu0 %178, %v26
    %v180 = vpop.permute.xlu0 %179
    %182 = vset.pattern.permute.xlu0 1
    %183 = vperm.xlu0 %182, %v27
    %v184 = vpop.permute.xlu0 %183
    %186 = vset.pattern.permute.xlu0 1
    %187 = vperm.xlu0 %186, %v28
    %v188 = vpop.permute.xlu0 %187
    %190 = vset.pattern.permute.xlu0 1
    %191 = vperm.xlu0 %190, %v29
    %v192 = vpop.permute.xlu0 %191
    %v194 = vlaneseq
    %v195 = vshrl.u32 %v194, 7
    %v196 = vsub.s32 0, %v195
    %v197 = vrot.slane %v13, %v196
    %vm198 = vcmp.gt.f32.partialorder %v132, %v197
    %vm199 = vcmp.gt.f32.partialorder %v136, %v197
    %vm200 = vcmp.gt.f32.partialorder %v140, %v197
    %vm201 = vcmp.gt.f32.partialorder %v144, %v197
    %vm202 = vcmp.gt.f32.partialorder %v148, %v197
    %vm203 = vcmp.gt.f32.partialorder %v152, %v197
    %vm204 = vcmp.gt.f32.partialorder %v156, %v197
    %vm205 = vcmp.gt.f32.partialorder %v160, %v197
    %vm206 = vcmp.gt.f32.partialorder %v164, %v197
    %vm207 = vcmp.gt.f32.partialorder %v168, %v197
    %vm208 = vcmp.gt.f32.partialorder %v172, %v197
    %vm209 = vcmp.gt.f32.partialorder %v176, %v197
    %vm210 = vcmp.gt.f32.partialorder %v180, %v197
    %vm211 = vcmp.gt.f32.partialorder %v184, %v197
    %vm212 = vcmp.gt.f32.partialorder %v188, %v197
    %vm213 = vcmp.gt.f32.partialorder %v192, %v197
    %vm214 = vmxor %vm114, %vm198
    %vm215 = vmxor %vm115, %vm199
    %vm216 = vmxor %vm116, %vm200
    %vm217 = vmxor %vm117, %vm201
    %vm218 = vmxor %vm118, %vm202
    %vm219 = vmxor %vm119, %vm203
    %vm220 = vmxor %vm120, %vm204
    %vm221 = vmxor %vm121, %vm205
    %vm222 = vmxor %vm122, %vm206
    %vm223 = vmxor %vm123, %vm207
    %vm224 = vmxor %vm124, %vm208
    %vm225 = vmxor %vm125, %vm209
    %vm226 = vmxor %vm126, %vm210
    %vm227 = vmxor %vm127, %vm211
    %vm228 = vmxor %vm128, %vm212
    %vm229 = vmxor %vm129, %vm213
    %v230 = vlaneseq
    %v231 = vshrl.u32 %v230, 7
    %v232 = vadd.s32 %v231, 8
    %v233 = vadd.s32 %v231, 16
    %v234 = vadd.s32 %v231, 24
    %v235 = vadd.s32 %v231, 32
    %v236 = vadd.s32 %v231, 40
    %v237 = vadd.s32 %v231, 48
    %v238 = vadd.s32 %v231, 56
    %v239 = vadd.s32 %v231, 64
    %v240 = vadd.s32 %v231, 72
    %v241 = vadd.s32 %v231, 80
    %v242 = vadd.s32 %v231, 88
    %v243 = vadd.s32 %v231, 96
    %v244 = vadd.s32 %v231, 104
    %v245 = vadd.s32 %v231, 112
    %v246 = vadd.s32 %v231, 120
    %v247 = vlaneseq
    %v248 = vand.u32 %v247, 127
    %vm249 = vcmp.lt.s32.totalorder %v231, %v248
    %vm250 = vcmp.lt.s32.totalorder %v232, %v248
    %vm251 = vcmp.lt.s32.totalorder %v233, %v248
    %vm252 = vcmp.lt.s32.totalorder %v234, %v248
    %vm253 = vcmp.lt.s32.totalorder %v235, %v248
    %vm254 = vcmp.lt.s32.totalorder %v236, %v248
    %vm255 = vcmp.lt.s32.totalorder %v237, %v248
    %vm256 = vcmp.lt.s32.totalorder %v238, %v248
    %vm257 = vcmp.lt.s32.totalorder %v239, %v248
    %vm258 = vcmp.lt.s32.totalorder %v240, %v248
    %vm259 = vcmp.lt.s32.totalorder %v241, %v248
    %vm260 = vcmp.lt.s32.totalorder %v242, %v248
    %vm261 = vcmp.lt.s32.totalorder %v243, %v248
    %vm262 = vcmp.lt.s32.totalorder %v244, %v248
    %vm263 = vcmp.lt.s32.totalorder %v245, %v248
    %vm264 = vcmp.lt.s32.totalorder %v246, %v248
    %vm265 = vcmp.lt.s32.totalorder %v248, 8
    %vm266 = vmand %vm249, %vm265
    %vm267 = vmand %vm250, %vm265
    %vm268 = vmand %vm251, %vm265
    %vm269 = vmand %vm252, %vm265
    %vm270 = vmand %vm253, %vm265
    %vm271 = vmand %vm254, %vm265
    %vm272 = vmand %vm255, %vm265
    %vm273 = vmand %vm256, %vm265
    %vm274 = vmand %vm257, %vm265
    %vm275 = vmand %vm258, %vm265
    %vm276 = vmand %vm259, %vm265
    %vm277 = vmand %vm260, %vm265
    %vm278 = vmand %vm261, %vm265
    %vm279 = vmand %vm262, %vm265
    %vm280 = vmand %vm263, %vm265
    %vm281 = vmand %vm264, %vm265
    %vm282 = vmand %vm266, %vm214
    %vm283 = vmand %vm267, %vm215
    %vm284 = vmand %vm268, %vm216
    %vm285 = vmand %vm269, %vm217
    %vm286 = vmand %vm270, %vm218
    %vm287 = vmand %vm271, %vm219
    %vm288 = vmand %vm272, %vm220
    %vm289 = vmand %vm273, %vm221
    %vm290 = vmand %vm274, %vm222
    %vm291 = vmand %vm275, %vm223
    %vm292 = vmand %vm276, %vm224
    %vm293 = vmand %vm277, %vm225
    %vm294 = vmand %vm278, %vm226
    %vm295 = vmand %vm279, %vm227
    %vm296 = vmand %vm280, %vm228
    %vm297 = vmand %vm281, %vm229
    %v298 = vsel %vm282, 1, 0
    %v299 = vsel %vm283, 1, 0
    %v300 = vsel %vm284, 1, 0
    %v301 = vsel %vm285, 1, 0
    %v302 = vsel %vm286, 1, 0
    %v303 = vsel %vm287, 1, 0
    %v304 = vsel %vm288, 1, 0
    %v305 = vsel %vm289, 1, 0
    %v306 = vsel %vm290, 1, 0
    %v307 = vsel %vm291, 1, 0
    %v308 = vsel %vm292, 1, 0
    %v309 = vsel %vm293, 1, 0
    %v310 = vsel %vm294, 1, 0
    %v311 = vsel %vm295, 1, 0
    %v312 = vsel %vm296, 1, 0
    %v313 = vsel %vm297, 1, 0
    %v314 = vcvt.s32.f32 %v298
    %v315 = vcvt.s32.f32 %v299
    %v316 = vcvt.s32.f32 %v300
    %v317 = vcvt.s32.f32 %v301
    %v318 = vcvt.s32.f32 %v302
    %v319 = vcvt.s32.f32 %v303
    %v320 = vcvt.s32.f32 %v304
    %v321 = vcvt.s32.f32 %v305
    %v322 = vcvt.s32.f32 %v306
    %v323 = vcvt.s32.f32 %v307
    %v324 = vcvt.s32.f32 %v308
    %v325 = vcvt.s32.f32 %v309
    %v326 = vcvt.s32.f32 %v310
    %v327 = vcvt.s32.f32 %v311
    %v328 = vcvt.s32.f32 %v312
    %v329 = vcvt.s32.f32 %v313
    %330 = vadd.xlane.f32.xlu0 %v314
    %v331 = vpop.xlane.xlu0 %330
    %332 = vadd.xlane.f32.xlu0 %v315
    %v333 = vpop.xlane.xlu0 %332
    %334 = vadd.xlane.f32.xlu0 %v316
    %v335 = vpop.xlane.xlu0 %334
    %336 = vadd.xlane.f32.xlu0 %v317
    %v337 = vpop.xlane.xlu0 %336
    %338 = vadd.xlane.f32.xlu0 %v318
    %v339 = vpop.xlane.xlu0 %338
    %340 = vadd.xlane.f32.xlu0 %v319
    %v341 = vpop.xlane.xlu0 %340
    %342 = vadd.xlane.f32.xlu0 %v320
    %v343 = vpop.xlane.xlu0 %342
    %344 = vadd.xlane.f32.xlu0 %v321
    %v345 = vpop.xlane.xlu0 %344
    %346 = vadd.xlane.f32.xlu0 %v322
    %v347 = vpop.xlane.xlu0 %346
    %348 = vadd.xlane.f32.xlu0 %v323
    %v349 = vpop.xlane.xlu0 %348
    %350 = vadd.xlane.f32.xlu0 %v324
    %v351 = vpop.xlane.xlu0 %350
    %352 = vadd.xlane.f32.xlu0 %v325
    %v353 = vpop.xlane.xlu0 %352
    %354 = vadd.xlane.f32.xlu0 %v326
    %v355 = vpop.xlane.xlu0 %354
    %356 = vadd.xlane.f32.xlu0 %v327
    %v357 = vpop.xlane.xlu0 %356
    %358 = vadd.xlane.f32.xlu0 %v328
    %v359 = vpop.xlane.xlu0 %358
    %360 = vadd.xlane.f32.xlu0 %v329
    %v361 = vpop.xlane.xlu0 %360
    %v362 = vadd.f32 %v314, %v315
    %v363 = vadd.f32 %v362, %v316
    %v364 = vadd.f32 %v363, %v317
    %v365 = vadd.f32 %v364, %v318
    %v366 = vadd.f32 %v365, %v319
    %v367 = vadd.f32 %v366, %v320
    %v368 = vadd.f32 %v367, %v321
    %v369 = vadd.f32 %v368, %v322
    %v370 = vadd.f32 %v369, %v323
    %v371 = vadd.f32 %v370, %v324
    %v372 = vadd.f32 %v371, %v325
    %v373 = vadd.f32 %v372, %v326
    %v374 = vadd.f32 %v373, %v327
    %v375 = vadd.f32 %v374, %v328
    %v376 = vadd.f32 %v375, %v329
    %v377 = vrot.slane %v376, 4
    %v378 = vadd.f32 %v376, %v377
    %v379 = vrot.slane %v378, 2
    %v380 = vadd.f32 %v378, %v379
    %v381 = vrot.slane %v380, 1
    %v382 = vadd.f32 %v380, %v381
    %v383 = vsub.f32 %v12, %v13
    %v384 = vand.u32 2147483647, %v383
    %385 = vrot.lane.b32.xlu0 %v14, 127
    %v386 = vpop.permute.xlu0 %385
    %387 = vrot.lane.b32.xlu0 %v15, 127
    %v388 = vpop.permute.xlu0 %387
    %389 = vrot.lane.b32.xlu0 %v16, 127
    %v390 = vpop.permute.xlu0 %389
    %391 = vrot.lane.b32.xlu0 %v17, 127
    %v392 = vpop.permute.xlu0 %391
    %393 = vrot.lane.b32.xlu0 %v18, 127
    %v394 = vpop.permute.xlu0 %393
    %395 = vrot.lane.b32.xlu0 %v19, 127
    %v396 = vpop.permute.xlu0 %395
    %397 = vrot.lane.b32.xlu0 %v20, 127
    %v398 = vpop.permute.xlu0 %397
    %399 = vrot.lane.b32.xlu0 %v21, 127
    %v400 = vpop.permute.xlu0 %399
    %401 = vrot.lane.b32.xlu0 %v22, 127
    %v402 = vpop.permute.xlu0 %401
    %403 = vrot.lane.b32.xlu0 %v23, 127
    %v404 = vpop.permute.xlu0 %403
    %405 = vrot.lane.b32.xlu0 %v24, 127
    %v406 = vpop.permute.xlu0 %405
    %407 = vrot.lane.b32.xlu0 %v25, 127
    %v408 = vpop.permute.xlu0 %407
    %409 = vrot.lane.b32.xlu0 %v26, 127
    %v410 = vpop.permute.xlu0 %409
    %411 = vrot.lane.b32.xlu0 %v27, 127
    %v412 = vpop.permute.xlu0 %411
    %413 = vrot.lane.b32.xlu0 %v28, 127
    %v414 = vpop.permute.xlu0 %413
    %415 = vrot.lane.b32.xlu0 %v29, 127
    %v416 = vpop.permute.xlu0 %415
    %v433 = vsub.f32 %v14, %v386
    %v434 = vsub.f32 %v15, %v388
    %v435 = vsub.f32 %v16, %v390
    %v436 = vsub.f32 %v17, %v392
    %v437 = vsub.f32 %v18, %v394
    %v438 = vsub.f32 %v19, %v396
    %v439 = vsub.f32 %v20, %v398
    %v440 = vsub.f32 %v21, %v400
    %v441 = vsub.f32 %v22, %v402
    %v442 = vsub.f32 %v23, %v404
    %v443 = vsub.f32 %v24, %v406
    %v444 = vsub.f32 %v25, %v408
    %v445 = vsub.f32 %v26, %v410
    %v446 = vsub.f32 %v27, %v412
    %v447 = vsub.f32 %v28, %v414
    %v448 = vsub.f32 %v29, %v416
    %v449 = vand.u32 2147483647, %v433
    %v450 = vand.u32 2147483647, %v434
    %v451 = vand.u32 2147483647, %v435
    %v452 = vand.u32 2147483647, %v436
    %v453 = vand.u32 2147483647, %v437
    %v454 = vand.u32 2147483647, %v438
    %v455 = vand.u32 2147483647, %v439
    %v456 = vand.u32 2147483647, %v440
    %v457 = vand.u32 2147483647, %v441
    %v458 = vand.u32 2147483647, %v442
    %v459 = vand.u32 2147483647, %v443
    %v460 = vand.u32 2147483647, %v444
    %v461 = vand.u32 2147483647, %v445
    %v462 = vand.u32 2147483647, %v446
    %v463 = vand.u32 2147483647, %v447
    %v464 = vand.u32 2147483647, %v448
    %v465 = vmul.f32 %v449, %v331
    %v466 = vmul.f32 %v450, %v333
    %v467 = vmul.f32 %v451, %v335
    %v468 = vmul.f32 %v452, %v337
    %v469 = vmul.f32 %v453, %v339
    %v470 = vmul.f32 %v454, %v341
    %v471 = vmul.f32 %v455, %v343
    %v472 = vmul.f32 %v456, %v345
    %v473 = vmul.f32 %v457, %v347
    %v474 = vmul.f32 %v458, %v349
    %v475 = vmul.f32 %v459, %v351
    %v476 = vmul.f32 %v460, %v353
    %v477 = vmul.f32 %v461, %v355
    %v478 = vmul.f32 %v462, %v357
    %v479 = vmul.f32 %v463, %v359
    %v480 = vmul.f32 %v464, %v361
    %vm481 = vcmask 7168
    %v482 = vsel %vm481, %v465, 0.0
    %v483 = vsel %vm481, %v466, 0.0
    %v484 = vadd.f32 %v482, %v483
    %v485 = vsel %vm481, %v467, 0.0
    %v486 = vadd.f32 %v484, %v485
    %v487 = vsel %vm481, %v468, 0.0
    %v488 = vadd.f32 %v486, %v487
    %v489 = vsel %vm481, %v469, 0.0
    %v490 = vadd.f32 %v488, %v489
    %v491 = vsel %vm481, %v470, 0.0
    %v492 = vadd.f32 %v490, %v491
    %v493 = vsel %vm481, %v471, 0.0
    %v494 = vadd.f32 %v492, %v493
    %v495 = vsel %vm481, %v472, 0.0
    %v496 = vadd.f32 %v494, %v495
    %v497 = vsel %vm481, %v473, 0.0
    %v498 = vadd.f32 %v496, %v497
    %v499 = vsel %vm481, %v474, 0.0
    %v500 = vadd.f32 %v498, %v499
    %v501 = vsel %vm481, %v475, 0.0
    %v502 = vadd.f32 %v500, %v501
    %v503 = vsel %vm481, %v476, 0.0
    %v504 = vadd.f32 %v502, %v503
    %v505 = vsel %vm481, %v477, 0.0
    %v506 = vadd.f32 %v504, %v505
    %v507 = vsel %vm481, %v478, 0.0
    %v508 = vadd.f32 %v506, %v507
    %v509 = vsel %vm481, %v479, 0.0
    %v510 = vadd.f32 %v508, %v509
    %v511 = vsel %vm481, %v480, 0.0
    %v512 = vadd.f32 %v510, %v511
    %513 = vadd.xlane.f32.xlu0 %v512
    %v514 = vpop.xlane.xlu0 %513
    %v515 = vrot.slane %v514, 4
    %v516 = vadd.f32 %v514, %v515
    %v517 = vrot.slane %v516, 2
    %v518 = vadd.f32 %v516, %v517
    %v519 = vrot.slane %v518, 1
    %v520 = vadd.f32 %v518, %v519
    %s521 = vtos %v520
    %v522 = vmul.f32 %v384, %v382
    %vm523 = vcmask 1040384
    %v524 = vsel %vm523, %v522, 0.0
    %525 = vadd.xlane.f32.xlu0 %v524
    %v526 = vpop.xlane.xlu0 %525
    %v527 = vrot.slane %v526, 4
    %v528 = vadd.f32 %v526, %v527
    %v529 = vrot.slane %v528, 2
    %v530 = vadd.f32 %v528, %v529
    %v531 = vrot.slane %v530, 1
    %v532 = vadd.f32 %v530, %v531
    %s533 = vtos %v532
    %s534 = sadd.f32 %s521, %s533
    %v535 = vrcp.pop 8.0
    %s536 = vtos %v535
    %s537 = smul.f32 %s534, %s536
    %v538 = vstv %s537
    %v539 = vadd.f32 %v538, 0.0
    %540 = vst [vmem:[#allocation2] sm:$0x1] %v539
    // Predicated region
    $region10: #{tpu_custom_call.1} parent=1 // pred_check
      _
    $region11: #{tpu_custom_call.1} parent=1 // pred_check_branch
      %542 = sbr.rel (0) target = $region13
    $region12: #{tpu_custom_call.1} parent=1 // pred_region
      %s544 = ssub.s32 16, 16
      %545 = vsyncadd [#allocation3], %s544
      %s547 = sshll.u32 [#allocation2], 4
      %s548 = int_to_ptr.vmem [resolvable:$true] %s547
      %550 = dma.vmem_to_hbm [thread:$0]  %s548, 16, %s2, [#allocation3]
    $region13: #{tpu_custom_call.1} parent=1 // pred_fallthru
      _
    // Predicated region
    $region14: #{tpu_custom_call.1} parent=1 // pred_check
      _
    $region15: #{tpu_custom_call.1} parent=1 // pred_check_branch
      %552 = sbr.rel (0) target = $region17
    $region16: #{tpu_custom_call.1} parent=1 // pred_region
      %553 = dma.done [#allocation3], 16
    $region17: #{tpu_custom_call.1} parent=1 // pred_fallthru
      _
    %554 = vsyncpa [#allocation3], 1

</llo_original>
